<compile_context>
chip_gen: v6e
topology: v6e:2x2x1
jax: 0.10.0
libtpu: 0.0.40
codegen_flags: <defaults>
</compile_context>

<pallas_src>
import functools
import numpy as np
import jax
import jax.numpy as jnp
from jax.experimental import pallas as pl
from jax.experimental.pallas import tpu as pltpu

EPS = 1e-15

_ROW_PAD = 32    # granularity for the M (LHS row) axis
_COL_PAD = 128   # granularity for K / N axes (lane dim)


def _round_up(x, m):
    return (x + m - 1) // m * m


def _pick_tile(padded_dim, candidates):
    for c in candidates:
        if padded_dim % c == 0:
            return c
    return padded_dim


def _pad_cast(x, rm, rn, dtype):
    M, N = x.shape
    Mp, Np = _round_up(M, rm), _round_up(N, rn)
    x = x.astype(dtype)
    if (Mp, Np) == (M, N):
        return x
    return jnp.zeros((Mp, Np), dtype).at[:M, :N].set(x)


def prepad_lhs(x):
    """Pad + bf16-cast an LHS operand once; reuse across pallas_matmul* calls."""
    return (_pad_cast(x, _ROW_PAD, _COL_PAD, jnp.bfloat16), x.shape)


# ----------------------------------------------------------------------------
# Pallas kernel 1: tiled MXU matmul, bf16 in / f32 accumulate into output block,
# optional fused bias epilogue, optional "nt" (a @ b.T) contraction.
# ----------------------------------------------------------------------------
def _make_mm_kernel(nt, with_bias):
    def kernel(*refs):
        if with_bias:
            a_ref, b_ref, bias_ref, o_ref = refs
        else:
            a_ref, b_ref, o_ref = refs
        k = pl.program_id(2)

        @pl.when(k == 0)
        def _():
            o_ref[...] = jnp.zeros_like(o_ref)

        if nt:
            part = jax.lax.dot_general(
                a_ref[...], b_ref[...], (((1,), (1,)), ((), ())),
                preferred_element_type=jnp.float32)
        else:
            part = jnp.dot(a_ref[...], b_ref[...],
                           preferred_element_type=jnp.float32)
        o_ref[...] += part

        if with_bias:
            @pl.when(k == pl.num_programs(2) - 1)
            def _():
                o_ref[...] += bias_ref[...]          # (1, tn) broadcast, VPU slack
    return kernel


def _mm_pallas(a_p, b_p, bias_p, Mp, Np, Kp, nt):
    tm = _pick_tile(Mp, (256, 128, 64, 32))
    tn = _pick_tile(Np, (256, 128))
    tk = _pick_tile(Kp, (512, 256, 128))
    with_bias = bias_p is not None

    if nt:
        b_spec = pl.BlockSpec((tn, tk), lambda i, j, k: (j, k))
    else:
        b_spec = pl.BlockSpec((tk, tn), lambda i, j, k: (k, j))
    in_specs = [pl.BlockSpec((tm, tk), lambda i, j, k: (i, k)), b_spec]
    operands = [a_p, b_p]
    if with_bias:
        in_specs.append(pl.BlockSpec((1, tn), lambda i, j, k: (0, j)))
        operands.append(bias_p)

    return pl.pallas_call(
        _make_mm_kernel(nt, with_bias),
        out_shape=jax.ShapeDtypeStruct((Mp, Np), jnp.float32),
        grid_spec=pltpu.PrefetchScalarGridSpec(
            num_scalar_prefetch=0,
            grid=(Mp // tm, Np // tn, Kp // tk),
            in_specs=in_specs,
            out_specs=pl.BlockSpec((tm, tn), lambda i, j, k: (i, j))),
        compiler_params=pltpu.CompilerParams(
            dimension_semantics=("parallel", "parallel", "arbitrary")),
    )(*operands)


def _lhs_as_padded(a):
    if isinstance(a, tuple):
        a_p, (M, K) = a
        return a_p, M, K
    M, K = a.shape
    return _pad_cast(a, _ROW_PAD, _COL_PAD, jnp.bfloat16), M, K


def pallas_matmul(a, b, bias=None):
    """a @ b (+ bias).  `a` may be a prepad_lhs() tuple."""
    a_p, M, K = _lhs_as_padded(a)
    K2, N = b.shape
    assert K == K2
    b_p = _pad_cast(b, _COL_PAD, _COL_PAD, jnp.bfloat16)
    bias_p = None
    if bias is not None:
        bias_p = _pad_cast(jnp.reshape(bias, (1, -1)).astype(jnp.float32),
                           1, _COL_PAD, jnp.float32)
    Mp, Kp = a_p.shape
    Np = b_p.shape[1]
    out = _mm_pallas(a_p, b_p, bias_p, Mp, Np, Kp, nt=False)
    return out[:M, :N]


def pallas_matmul_nt(a, b):
    """a @ b.T without materializing the transpose.  `a` may be prepad_lhs()."""
    a_p, M, K = _lhs_as_padded(a)
    N, K2 = b.shape
    assert K == K2
    b_p = _pad_cast(b, _COL_PAD, _COL_PAD, jnp.bfloat16)
    Mp, Kp = a_p.shape
    Np = b_p.shape[0]
    out = _mm_pallas(a_p, b_p, None, Mp, Np, Kp, nt=True)
    return out[:M, :N]


# ----------------------------------------------------------------------------
# Pallas kernel 2: fused Student-t soft assignment + row normalization (DEC).
# ----------------------------------------------------------------------------
def _soft_assign_kernel(z_ref, mu_ref, mu2_ref, q_ref, *, n_centroids, alpha):
    z = z_ref[...]                                          # (tm, Dp) f32
    mu = mu_ref[...]                                        # (Cp, Dp) f32
    z2 = jnp.sum(z * z, axis=1, keepdims=True)              # (tm, 1)
    cross = jax.lax.dot_general(z, mu, (((1,), (1,)), ((), ())),
                                preferred_element_type=jnp.float32)
    dist = jnp.maximum(z2 + mu2_ref[...] - 2.0 * cross, 0.0)  # clamp f32 cancellation
    q = pl.reciprocal(1.0 + dist * (1.0 / alpha), approx=True)
    power = (alpha + 1.0) / 2.0
    if power != 1.0:                                        # exponent==1 -> no-op
        q = q ** power
    col = jax.lax.broadcasted_iota(jnp.int32, q.shape, 1)
    q = jnp.where(col < n_centroids, q, 0.0)                # mask padded centroids
    q = q * pl.reciprocal(jnp.sum(q, axis=1, keepdims=True), approx=True)
    q_ref[...] = q


def pallas_soft_assign(z, mu, alpha=1.0):
    N, D = z.shape
    C, D2 = mu.shape
    assert D == D2
    Np, Dp, Cp = _round_up(N, _ROW_PAD), _round_up(D, 128), _round_up(C, 128)
    z_p = _pad_cast(z.astype(jnp.float32), _ROW_PAD, 128, jnp.float32)
    mu_p = _pad_cast(mu.astype(jnp.float32), 128, 128, jnp.float32)
    mu2 = jnp.sum(mu_p * mu_p, axis=1)[None, :]             # (1, Cp), hoisted
    tm = _pick_tile(Np, (256, 128, 64, 32))
    q = pl.pallas_call(
        functools.partial(_soft_assign_kernel, n_centroids=C, alpha=alpha),
        out_shape=jax.ShapeDtypeStruct((Np, Cp), jnp.float32),
        grid_spec=pltpu.PrefetchScalarGridSpec(
            num_scalar_prefetch=0,
            grid=(Np // tm,),
            in_specs=[pl.BlockSpec((tm, Dp), lambda i: (i, 0)),
                      pl.BlockSpec((Cp, Dp), lambda i: (0, 0)),
                      pl.BlockSpec((1, Cp), lambda i: (0, 0))],
            out_specs=pl.BlockSpec((tm, Cp), lambda i: (i, 0))),
        compiler_params=pltpu.CompilerParams(
            dimension_semantics=("parallel",)),
    )(z_p, mu_p, mu2)
    return q[:N, :C]


# ----------------------------------------------------------------------------
# Plain-JAX glue: normalization, batch-norm (train mode), PReLU, GCN adj.
# ----------------------------------------------------------------------------
def l2_normalize(x, axis=-1):
    n = jnp.sqrt(jnp.sum(x * x, axis=axis, keepdims=True))
    return x / jnp.maximum(n, 1e-12)


def batch_norm_train(x, gamma, beta, eps=1e-5):
    mean = jnp.mean(x, axis=0, keepdims=True)
    var = jnp.mean((x - mean) ** 2, axis=0, keepdims=True)
    return (x - mean) / jnp.sqrt(var + eps) * gamma + beta


def prelu(x, w):
    return jnp.maximum(x, 0.0) + w * jnp.minimum(x, 0.0)


def gcn_norm_adj(edge_index, n):
    A = jnp.zeros((n, n), jnp.float32)
    A = A.at[edge_index[0], edge_index[1]].set(1.0)
    A = A.at[jnp.arange(n), jnp.arange(n)].set(1.0)           # add self loops
    deg = jnp.sum(A, axis=1)
    d_inv_sqrt = jnp.where(deg > 0, 1.0 / jnp.sqrt(deg), 0.0)
    return d_inv_sqrt[:, None] * A * d_inv_sqrt[None, :]


def dense_adj(edge_index, n):
    A = jnp.zeros((n, n), jnp.float32)
    return A.at[edge_index[0], edge_index[1]].set(1.0)


# ----------------------------------------------------------------------------
# Parameter initialization (deterministic, synthetic).
# ----------------------------------------------------------------------------
def _glorot(key, fan_in, fan_out):
    lim = np.sqrt(6.0 / (fan_in + fan_out))
    return jax.random.uniform(key, (fan_in, fan_out), jnp.float32, -lim, lim)


def init_params(key, layer_config, pred_hid, num_centroids):
    rep_dim = layer_config[-1]
    keys = jax.random.split(key, 16)
    params = {"enc": [], "pred": {}, "mu": None}
    for i in range(1, len(layer_config)):
        d_in, d_out = layer_config[i - 1], layer_config[i]
        params["enc"].append({
            "W": _glorot(keys[i], d_in, d_out),
            "b": jnp.zeros((d_out,), jnp.float32),
            "bn_gamma": jnp.ones((d_out,), jnp.float32),
            "bn_beta": jnp.zeros((d_out,), jnp.float32),
            "prelu": jnp.float32(0.25),
        })
    params["pred"] = {
        "W1": _glorot(keys[8], rep_dim, pred_hid),
        "b1": jnp.zeros((pred_hid,), jnp.float32),
        "bn_gamma": jnp.ones((pred_hid,), jnp.float32),
        "bn_beta": jnp.zeros((pred_hid,), jnp.float32),
        "prelu": jnp.float32(0.25),
        "W2": _glorot(keys[9], pred_hid, rep_dim),
        "b2": jnp.zeros((rep_dim,), jnp.float32),
    }
    # nn.Parameter(torch.Tensor(...)) is uninitialized -> random surrogate
    params["mu"] = jax.random.normal(keys[10], (num_centroids, rep_dim), jnp.float32)
    return params


# ----------------------------------------------------------------------------
# Encoder / predictor forward (all matmuls through the Pallas kernel).
# ----------------------------------------------------------------------------
def encoder_forward(enc_params, x, a_hat_pad):
    # TODO(synk): Encoder class body is not given upstream; standard GCN
    # (GCNConv -> BatchNorm1d -> PReLU per layer, dropout unused) assumed.
    h = x
    for lp in enc_params:
        support = pallas_matmul(h, lp["W"])                       # X @ W
        h = pallas_matmul(a_hat_pad, support, bias=lp["b"])       # A_hat @ XW + b (fused)
        h = batch_norm_train(h, lp["bn_gamma"], lp["bn_beta"])
        h = prelu(h, lp["prelu"])
    return h


def predictor_forward(pp, x):
    h = pallas_matmul(x, pp["W1"], bias=pp["b1"])                 # fused bias
    h = batch_norm_train(h, pp["bn_gamma"], pp["bn_beta"])
    h = prelu(h, pp["prelu"])
    return pallas_matmul(h, pp["W2"], bias=pp["b2"])              # fused bias


# ----------------------------------------------------------------------------
# Neighbor module: similarity matmul in Pallas, batched k-means, dense masks.
# ----------------------------------------------------------------------------
def batched_kmeans_labels(x, k, num_runs, niter, base_seed):
    # TODO(synk): faiss.Kmeans has no Pallas/JAX equivalent; replaced with a
    # deterministic batched Lloyd's k-means (cluster ids may differ from faiss).
    n, d = x.shape
    x_pad = prepad_lhs(x)                                         # pad/cast once
    x2 = jnp.sum(x * x, axis=1, keepdims=True)                    # (n, 1)

    cents = []
    for r in range(num_runs):
        key = jax.random.PRNGKey(base_seed + r)
        idx = jax.random.permutation(key, n)[:k]
        cents.append(x[idx])
    cents = jnp.stack(cents, axis=0)                              # (R, k, d)

    def assign(cents):
        flat = cents.reshape(num_runs * k, d)
        cross = pallas_matmul_nt(x_pad, flat)                     # (n, R*k)
        c2 = jnp.sum(flat * flat, axis=1)[None, :]
        d2 = (x2 + c2 - 2.0 * cross).reshape(n, num_runs, k)
        return jnp.argmin(d2, axis=2)                             # (n, R)

    for _ in range(niter):
        labels = assign(cents)
        onehot = jax.nn.one_hot(labels, k, dtype=jnp.float32)     # (n, R, k)
        counts = jnp.sum(onehot, axis=0)                          # (R, k)
        sums = jnp.einsum('nrk,nd->rkd', onehot, x)               # tiny, XLA glue
        new_cents = sums / jnp.maximum(counts, 1.0)[..., None]
        cents = jnp.where(counts[..., None] > 0, new_cents, cents)

    return assign(cents).T                                        # (R, n)


def neighbor_forward(adj, student_n, teacher_n, top_k,
                     num_centroids, num_kmeans, clus_num_iters):
    n = student_n.shape[0]
    similarity = pallas_matmul_nt(student_n, teacher_n)           # no .T materialized
    similarity = similarity + jnp.eye(n, dtype=jnp.float32) * 10.0
    _, I_knn = jax.lax.top_k(similarity, top_k)                   # (n, top_k)

    rows = jnp.repeat(jnp.arange(n), top_k)
    cols = I_knn.reshape(-1)
    knn_dense = jnp.zeros((n, n), jnp.float32).at[rows, cols].set(1.0)
    locality = knn_dense * adj

    cluster_labels = batched_kmeans_labels(
        teacher_n, num_centroids, num_kmeans, clus_num_iters, 1234)   # (R, n)

    all_close = jnp.zeros((n, top_k), bool)
    for r in range(num_kmeans):
        batch_labels = cluster_labels[r]
        top_labels = cluster_labels[r][I_knn]
        all_close = all_close | (batch_labels[:, None] == top_labels)

    globality = jnp.zeros((n, n), jnp.float32).at[rows, cols].add(
        all_close.reshape(-1).astype(jnp.float32))

    pos = locality + globality
    pos_mask = pos > 0          # dense surrogate of sparse coalesce()._indices()
    return pos_mask, top_k


# ----------------------------------------------------------------------------
# Losses.
# ----------------------------------------------------------------------------
def grl_loss_from_mask(pred, teacher, pos_mask):
    # BYOL loss_fn(x, y) = 2 - 2 * <x_n, y_n>; loss1 + loss2 per edge (i,j) is
    # 4 - 2*(S1[i,j] + S1[j,i]).  Avoid materializing per_edge / S1.T:
    #   sum_m per_edge = 4*sum(m) - 2*sum((m + m.T) * S1)
    pred_n = l2_normalize(pred)
    teach_n = l2_normalize(teacher)
    S1 = pallas_matmul_nt(pred_n, teach_n)                        # (n, n)
    m = pos_mask.astype(jnp.float32)
    msum = jnp.sum(m)
    loss_sum = 4.0 * msum - 2.0 * jnp.sum((m + m.T) * S1)
    return loss_sum / jnp.maximum(msum, 1.0)


def soft_cluster_loss(student, mu, alpha=1.0):
    q = pallas_soft_assign(student, mu, alpha=alpha)              # rows sum to 1
    p = q ** 2 / jnp.sum(q, axis=0)                               # target distribution
    p = p / jnp.sum(p, axis=1, keepdims=True)
    p = jax.lax.stop_gradient(p)
    kld = jnp.mean(jnp.sum(p * jnp.log(p / (q + 1e-6)), axis=-1))
    return kld


# ----------------------------------------------------------------------------
# scAFGCC forward.
# ----------------------------------------------------------------------------
def scafgcc_forward(params, x, y, edge_index, neighbor, *, topk,
                    num_centroids, num_kmeans, clus_num_iters, edge_weight=None):
    n = x.shape[0]
    a_hat = gcn_norm_adj(edge_index, n)
    a_hat_pad = prepad_lhs(a_hat)                                 # pad/cast once

    student = encoder_forward(params["enc"], x, a_hat_pad)
    pred = predictor_forward(params["pred"], student)
    # teacher encoder is a deepcopy of the student encoder (identical params and
    # input) -> identical output; reuse student instead of recomputing.
    teacher = jax.lax.stop_gradient(student)

    if edge_weight is None:
        adj = dense_adj(neighbor[0], n)
    else:
        adj = jnp.zeros((n, n), jnp.float32).at[
            neighbor[0][0], neighbor[0][1]].set(neighbor[1])

    pos_mask, k = neighbor_forward(
        adj, l2_normalize(student), l2_normalize(teacher), topk,
        num_centroids, num_kmeans, clus_num_iters)

    grl = grl_loss_from_mask(pred, teacher, pos_mask)
    kl = soft_cluster_loss(student, params["mu"], alpha=1.0)
    loss = 0.8 * grl + 0.2 * kl

    # sparse COO indices of pos_ (row-major, matching coalesce() ordering).
    # NOTE: data-dependent shape -> only valid outside jax.jit (eager here).
    ind = jnp.stack(jnp.nonzero(pos_mask), axis=0)
    return student, loss, ind, k


# ----------------------------------------------------------------------------
if __name__ == "__main__":
    key = jax.random.PRNGKey(0)
    N, in_dim = 32, 16
    layer_config = [in_dim, 32, 16]      # rep_dim = 16
    pred_hid = 32
    num_centroids = 4
    num_kmeans = 2
    clus_num_iters = 5
    topk = 4

    k_feat, k_par = jax.random.split(key)
    x = jax.random.normal(k_feat, (N, in_dim), jnp.float32)
    y = jnp.zeros((N,), jnp.int32)       # unused by forward

    # deterministic ring graph (symmetric, no self loops)
    src = jnp.arange(N)
    dst = (src + 1) % N
    edge_index = jnp.stack([jnp.concatenate([src, dst]),
                            jnp.concatenate([dst, src])], axis=0)
    neighbor = (edge_index, None)

    params = init_params(k_par, layer_config, pred_hid, num_centroids)

    student, loss, ind, k = scafgcc_forward(
        params, x, y, edge_index, neighbor, topk=topk,
        num_centroids=num_centroids, num_kmeans=num_kmeans,
        clus_num_iters=clus_num_iters)

    jax.block_until_ready((student, loss, ind))
    assert student.shape == (N, layer_config[-1])
    assert jnp.isfinite(loss)
    assert ind.shape[0] == 2 and k == topk
    print("KERNEL_OK")
</pallas_src>

<mosaic_0001>
module attributes {stable_mosaic.version = 11 : i64} {
  func.func @kernel(%arg0: i32, %arg1: i32, %arg2: i32, %arg3: memref<32x128xbf16, #tpu.memory_space<vmem>>, %arg4: memref<128x128xbf16, #tpu.memory_space<vmem>>, %arg5: memref<32x128xf32, #tpu.memory_space<vmem>>) attributes {dimension_semantics = [#tpu.dimension_semantics<parallel>, #tpu.dimension_semantics<parallel>, #tpu.dimension_semantics<arbitrary>], iteration_bounds = array<i64: 1, 1, 1>, scalar_prefetch = 0 : i64, scratch_operands = 0 : i64, tpu.core_type = #tpu.core_type<tc>, window_params = [{transform_indices = @transform_0, window_bounds = array<i64: 32, 128>}, {transform_indices = @transform_1, window_bounds = array<i64: 128, 128>}, {transform_indices = @transform_2, window_bounds = array<i64: 32, 128>}]} {
    %c0_i32 = arith.constant 0 : i32
    %0 = arith.cmpi eq, %arg2, %c0_i32 : i32
    %1 = arith.extui %0 : i1 to i32
    %c0_i32_0 = arith.constant 0 : i32
    %2 = arith.cmpi ne, %1, %c0_i32_0 : i32
    scf.if %2 {
      %cst_8 = arith.constant 0.000000e+00 : f32
      %9 = vector.broadcast %cst_8 : f32 to vector<32x128xf32>
      %c0_9 = arith.constant 0 : index
      %c0_10 = arith.constant 0 : index
      %10 = vector.load %arg5[%c0_9, %c0_10] : memref<32x128xf32, #tpu.memory_space<vmem>>, vector<32x128xf32>
      tpu.vector_store %arg5[%c0_9, %c0_10], %9 {strides = array<i32>} : memref<32x128xf32, #tpu.memory_space<vmem>>, vector<32x128xf32>,
    } else {
    }
    %c0 = arith.constant 0 : index
    %c0_1 = arith.constant 0 : index
    %3 = vector.load %arg3[%c0, %c0_1] : memref<32x128xbf16, #tpu.memory_space<vmem>>, vector<32x128xbf16>
    %c0_2 = arith.constant 0 : index
    %c0_3 = arith.constant 0 : index
    %4 = vector.load %arg4[%c0_2, %c0_3] : memref<128x128xbf16, #tpu.memory_space<vmem>>, vector<128x128xbf16>
    %cst = arith.constant dense<0.000000e+00> : vector<32x128xf32>
    %5 = tpu.matmul %3, %4, %cst {dimension_numbers = #tpu.dot_dimension_numbers<[1], [0], [0], [1], [0, 0, 1, 1], [], []>} : vector<32x128xbf16>, vector<128x128xbf16>, vector<32x128xf32> -> vector<32x128xf32>
    %c0_4 = arith.constant 0 : index
    %c0_5 = arith.constant 0 : index
    %6 = vector.load %arg5[%c0_4, %c0_5] : memref<32x128xf32, #tpu.memory_space<vmem>>, vector<32x128xf32>
    %7 = arith.addf %6, %5 : vector<32x128xf32>
    %c0_6 = arith.constant 0 : index
    %c0_7 = arith.constant 0 : index
    %8 = vector.load %arg5[%c0_6, %c0_7] : memref<32x128xf32, #tpu.memory_space<vmem>>, vector<32x128xf32>
    tpu.vector_store %arg5[%c0_6, %c0_7], %7 {strides = array<i32>} : memref<32x128xf32, #tpu.memory_space<vmem>>, vector<32x128xf32>,
    return
  }
  func.func @transform_0(%arg0: i32, %arg1: i32, %arg2: i32) -> (i32, i32) {
    %c0_i32 = arith.constant 0 : i32
    return %arg0, %arg2 : i32, i32
  }
  func.func @transform_1(%arg0: i32, %arg1: i32, %arg2: i32) -> (i32, i32) {
    %c0_i32 = arith.constant 0 : i32
    return %arg2, %arg1 : i32, i32
  }
  func.func @transform_2(%arg0: i32, %arg1: i32, %arg2: i32) -> (i32, i32) {
    %c0_i32 = arith.constant 0 : i32
    return %arg0, %arg1 : i32, i32
  }
}

</mosaic_0001>

<llo_original>
// kernel: tpu_custom_call.1
$region0: #{tpu_custom_call.1}
  #allocation0 [shape = 'u32[]', space=smem, size = 0x4, offset = 0x4, fixed_abs, tag = 'smem constant byte address 0x4 - core index']
  #allocation1 [shape = 'u32[144,128]{1,0:T(1,128)}', space=vmem, size = 0x12000, scoped, tag = 'internal scratch']
  %s0 = inlined_call_operand.hbm [shape: bf16[32,128], index: 0, kind: input, shape index: {}]
  %s1 = inlined_call_operand.hbm [shape: bf16[128,128], index: 1, kind: input, shape index: {}]
  %s2 = inlined_call_operand.hbm [shape: f32[32,128], index: 2, kind: output, shape index: {}]
  %s3 = sld [smem:[#allocation0]]
  $region30: #{tpu_custom_call.1} parent=0
    _
  %s5 = ssub.s32 1, %s3
  %s6 = scalar_select 0, %s5, %s3
  $region1: #{tpu_custom_call.1} parent=0
    #allocation2 [shape = 'u8[8192]{0}', space=vmem, size = 0x2000, scoped, tag = 'input window, operand 0, single buffered']
    #allocation3 [shape = 's32[1]{0}', space=sflag, size = 0x4, scoped, tag = 'scoped memory for tpu_custom_call.1']
    #allocation4 [shape = 's32[1]{0}', space=sflag, size = 0x4, scoped, tag = 'scoped memory for tpu_custom_call.1']
    #allocation5 [shape = 'u8[32768]{0}', space=vmem, size = 0x8000, scoped, tag = 'input window, operand 1, single buffered']
    #allocation6 [shape = 's32[1]{0}', space=sflag, size = 0x4, scoped, tag = 'scoped memory for tpu_custom_call.1']
    #allocation7 [shape = 'u8[16384]{0}', space=vmem, size = 0x4000, scoped, tag = 'output window, operand 0, single buffered']
    %7 = vsyncpa [#allocation3], 0
    %8 = vsyncpa [#allocation6], 0
    %9 = vsyncpa [#allocation4], 0
    // Predicated region
    $region2: #{tpu_custom_call.1} parent=1 // pred_check
      _
    $region3: #{tpu_custom_call.1} parent=1 // pred_check_branch
      %11 = sbr.rel (0) target = $region5
    $region4: #{tpu_custom_call.1} parent=1 // pred_region
      %s13 = ssub.s32 256, 256
      %14 = vsyncadd [#allocation3], %s13
      %s15 = sshll.u32 [#allocation2], 4
      %s16 = int_to_ptr.vmem [resolvable:$true] %s15
      %21 = dma.hbm_to_vmem [thread:$0]  %s0, 256, %s16, [#allocation3], 64, 64, 4
    $region5: #{tpu_custom_call.1} parent=1 // pred_fallthru
      _
    // Predicated region
    $region6: #{tpu_custom_call.1} parent=1 // pred_check
      _
    $region7: #{tpu_custom_call.1} parent=1 // pred_check_branch
      %23 = sbr.rel (0) target = $region9
    $region8: #{tpu_custom_call.1} parent=1 // pred_region
      %s25 = ssub.s32 1024, 1024
      %26 = vsyncadd [#allocation6], %s25
      %s27 = sshll.u32 [#allocation5], 4
      %s28 = int_to_ptr.vmem [resolvable:$true] %s27
      %33 = dma.hbm_to_vmem [thread:$0]  %s1, 1024, %s28, [#allocation6], 64, 64, 4
    $region9: #{tpu_custom_call.1} parent=1 // pred_fallthru
      _
    // Predicated region
    $region10: #{tpu_custom_call.1} parent=1 // pred_check
      _
    $region11: #{tpu_custom_call.1} parent=1 // pred_check_branch
      %35 = sbr.rel (0) target = $region13
    $region12: #{tpu_custom_call.1} parent=1 // pred_region
      %36 = dma.done [#allocation3], 256
    $region13: #{tpu_custom_call.1} parent=1 // pred_fallthru
      _
    // Predicated region
    $region14: #{tpu_custom_call.1} parent=1 // pred_check
      _
    $region15: #{tpu_custom_call.1} parent=1 // pred_check_branch
      %38 = sbr.rel (0) target = $region17
    $region16: #{tpu_custom_call.1} parent=1 // pred_region
      %39 = dma.done [#allocation6], 1024
    $region17: #{tpu_custom_call.1} parent=1 // pred_fallthru
      _
    %p41 = scmp.eq.s32.totalorder 0, 0
    // Predicated region
    $region18: #{tpu_custom_call.1} parent=1 // pred_check
      %p42 = pneg %p41
    $region19: #{tpu_custom_call.1} parent=1 // pred_check_branch
      %44 = sbr.rel (%p42) target = $region21
    $region20: #{tpu_custom_call.1} parent=1 // pred_region
      %45 = vst [vmem:[#allocation7] sm:$0xff] 0.0
      %46 = vst [vmem:[#allocation7 + $0x8] sm:$0xff] 0.0
      %47 = vst [vmem:[#allocation7 + $0x10] sm:$0xff] 0.0
      %48 = vst [vmem:[#allocation7 + $0x18] sm:$0xff] 0.0
    $region21: #{tpu_custom_call.1} parent=1 // pred_fallthru
      _
    %v49 = vld [vmem:[#allocation2] sm:$0xf]
    %v50 = vld [vmem:[#allocation2 + $0x4] sm:$0xf]
    %v51 = vld [vmem:[#allocation2 + $0x8] sm:$0xf]
    %v52 = vld [vmem:[#allocation2 + $0xc] sm:$0xf]
    %v53 = vld [vmem:[#allocation5] sm:$0xf]
    %v54 = vld [vmem:[#allocation5 + $0x4] sm:$0xf]
    %v55 = vld [vmem:[#allocation5 + $0x8] sm:$0xf]
    %v56 = vld [vmem:[#allocation5 + $0xc] sm:$0xf]
    %v57 = vld [vmem:[#allocation5 + $0x10] sm:$0xf]
    %v58 = vld [vmem:[#allocation5 + $0x14] sm:$0xf]
    %v59 = vld [vmem:[#allocation5 + $0x18] sm:$0xf]
    %v60 = vld [vmem:[#allocation5 + $0x1c] sm:$0xf]
    %v61 = vld [vmem:[#allocation5 + $0x20] sm:$0xf]
    %v62 = vld [vmem:[#allocation5 + $0x24] sm:$0xf]
    %v63 = vld [vmem:[#allocation5 + $0x28] sm:$0xf]
    %v64 = vld [vmem:[#allocation5 + $0x2c] sm:$0xf]
    %v65 = vld [vmem:[#allocation5 + $0x30] sm:$0xf]
    %v66 = vld [vmem:[#allocation5 + $0x34] sm:$0xf]
    %v67 = vld [vmem:[#allocation5 + $0x38] sm:$0xf]
    %v68 = vld [vmem:[#allocation5 + $0x3c] sm:$0xf]
    %v73 = vunpack.c.l.b16 %v49
    %v74 = vunpack.c.l.b16 %v50
    %v75 = vunpack.c.l.b16 %v51
    %v76 = vunpack.c.l.b16 %v52
    %v77 = vpack.c.b16 %v74, %v73
    %v78 = vpack.c.b16 %v76, %v75
    %v97 = vunpack.c.l.b16 %v53
    %v98 = vunpack.c.l.b16 %v54
    %v99 = vunpack.c.l.b16 %v55
    %v100 = vunpack.c.l.b16 %v56
    %v101 = vunpack.c.l.b16 %v57
    %v102 = vunpack.c.l.b16 %v58
    %v103 = vunpack.c.l.b16 %v59
    %v104 = vunpack.c.l.b16 %v60
    %v105 = vunpack.c.l.b16 %v61
    %v106 = vunpack.c.l.b16 %v62
    %v107 = vunpack.c.l.b16 %v63
    %v108 = vunpack.c.l.b16 %v64
    %v109 = vunpack.c.l.b16 %v65
    %v110 = vunpack.c.l.b16 %v66
    %v111 = vunpack.c.l.b16 %v67
    %v112 = vunpack.c.l.b16 %v68
    %v113 = vpack.c.b16 %v98, %v97
    %v114 = vpack.c.b16 %v100, %v99
    %v115 = vpack.c.b16 %v102, %v101
    %v116 = vpack.c.b16 %v104, %v103
    %v117 = vpack.c.b16 %v106, %v105
    %v118 = vpack.c.b16 %v108, %v107
    %v119 = vpack.c.b16 %v110, %v109
    %v120 = vpack.c.b16 %v112, %v111
    %129 = vmatprep.subr.bf16.mxu0 0
    %130 = vmatpush1.bf16.msra.mxu0 %v120
    %131 = vmatprep.subr.bf16.mxu0 0
    %132 = vmatpush1.bf16.msra.mxu0 %v119
    %133 = vmatprep.subr.bf16.mxu0 0
    %134 = vmatpush1.bf16.msra.mxu0 %v118
    %135 = vmatprep.subr.bf16.mxu0 0
    %136 = vmatpush1.bf16.msra.mxu0 %v117
    %137 = vmatprep.subr.bf16.mxu0 0
    %138 = vmatpush1.bf16.msra.mxu0 %v116
    %139 = vmatprep.subr.bf16.mxu0 0
    %140 = vmatpush1.bf16.msra.mxu0 %v115
    %141 = vmatprep.subr.bf16.mxu0 0
    %142 = vmatpush1.bf16.msra.mxu0 %v114
    %143 = vmatprep.subr.bf16.mxu0 0
    %144 = vmatpush1.bf16.msra.mxu0 %v113
    %145 = vmatprep.subr.bf16.mxu0 0
    %146 = vmatpush2.bf16.msra.mxu0 0
    %147 = vmatprep.subr.bf16.mxu0 0
    %148 = vmatpush2.bf16.msra.mxu0 0
    %149 = vmatprep.subr.bf16.mxu0 0
    %150 = vmatpush2.bf16.msra.mxu0 0
    %151 = vmatprep.subr.bf16.mxu0 0
    %152 = vmatpush2.bf16.msra.mxu0 0
    %153 = vmatprep.subr.bf16.mxu0 0
    %154 = vmatpush2.bf16.msra.mxu0 0
    %155 = vmatprep.subr.bf16.mxu0 0
    %156 = vmatpush2.bf16.msra.mxu0 0
    %157 = vmatprep.subr.bf16.mxu0 0
    %158 = vmatpush2.bf16.msra.mxu0 0
    %159 = vmatprep.subr.bf16.mxu0 0
    %160 = vmatpush2.bf16.msra.mxu0 0
    %161 = vmatprep.mubr.bf16.mxu0 0
    %162 = vmatmul.mubr.bf16.gmra.mxu0 %v77
    %v163 = vpop.f32.mrf.mxu0
    %v164 = vadd.f32 0.0, %v163
    %v165 = vpop.f32.mrf.mxu0
    %v166 = vpop.f32.mrf.mxu0
    %v167 = vadd.f32 0.0, %v166
    %v168 = vpop.f32.mrf.mxu0
    %169 = vmatprep.mubr.bf16.mxu0 0
    %170 = vmatmul.mubr.bf16.gmra.mxu0 %v78
    %v171 = vpop.f32.mrf.mxu0
    %v172 = vadd.f32 0.0, %v171
    %v173 = vpop.f32.mrf.mxu0
    %v174 = vpop.f32.mrf.mxu0
    %v175 = vadd.f32 0.0, %v174
    %v176 = vpop.f32.mrf.mxu0
    %177 = vdwg.mxu0
    %v178 = vld [vmem:[#allocation7] sm:$0xff]
    %v179 = vld [vmem:[#allocation7 + $0x8] sm:$0xff]
    %v180 = vld [vmem:[#allocation7 + $0x10] sm:$0xff]
    %v181 = vld [vmem:[#allocation7 + $0x18] sm:$0xff]
    %v182 = vadd.f32 %v178, %v164
    %v183 = vadd.f32 %v179, %v167
    %v184 = vadd.f32 %v180, %v172
    %v185 = vadd.f32 %v181, %v175
    %186 = vst [vmem:[#allocation7] sm:$0xff] %v182
    %187 = vst [vmem:[#allocation7 + $0x8] sm:$0xff] %v183
    %188 = vst [vmem:[#allocation7 + $0x10] sm:$0xff] %v184
    %189 = vst [vmem:[#allocation7 + $0x18] sm:$0xff] %v185
    // Predicated region
    $region22: #{tpu_custom_call.1} parent=1 // pred_check
      _
    $region23: #{tpu_custom_call.1} parent=1 // pred_check_branch
      %191 = sbr.rel (0) target = $region25
    $region24: #{tpu_custom_call.1} parent=1 // pred_region
      %s193 = ssub.s32 512, 512
      %194 = vsyncadd [#allocation4], %s193
      %s195 = sshll.u32 [#allocation7], 4
      %s196 = int_to_ptr.vmem [resolvable:$true] %s195
      %201 = dma.vmem_to_hbm [thread:$0]  %s196, 512, %s2, [#allocation4], 128, 128, 8
    $region25: #{tpu_custom_call.1} parent=1 // pred_fallthru
      _
    // Predicated region
    $region26: #{tpu_custom_call.1} parent=1 // pred_check
      _
    $region27: #{tpu_custom_call.1} parent=1 // pred_check_branch
      %203 = sbr.rel (0) target = $region29
    $region28: #{tpu_custom_call.1} parent=1 // pred_region
      %204 = dma.done [#allocation4], 512
    $region29: #{tpu_custom_call.1} parent=1 // pred_fallthru
      _
    %205 = vsyncpa [#allocation3], 1
    %206 = vsyncpa [#allocation6], 1
    %207 = vsyncpa [#allocation4], 1

</llo_original>
